<compile_context>
chip_gen: v7x
topology: tpu7x:2x2x1
jax: 0.10.0
libtpu: 0.0.40
codegen_flags: <defaults>
</compile_context>

<pallas_src>
import jax
import jax.numpy as jnp
from jax.experimental import pallas as pl
from jax.experimental.pallas import tpu as pltpu

ALPHA = 2
BETA = 4
EPS = 1e-14
LANES = 128


def _cdiv(a, b):
    return -(-a // b)


def _heatmap_loss_kernel(x_ref, t_ref, out_ref):
    x = x_ref[...].astype(jnp.float32)
    t = t_ref[...].astype(jnp.float32)

    is_center = t == 1.0
    omx = 1.0 - x
    omt = 1.0 - t
    # One EUP log per element; the selected coefficient is squared once:
    #   center:     base = (1-x)        -> coef = (1-x)^2
    #   non-center: base = (1-t)^2 * x  -> coef = (1-t)^4 * x^2
    sel = jnp.where(is_center, x, omx)
    base = jnp.where(is_center, omx, (omt * omt) * x)
    coef = base * base
    # Positive accumulation; the wrapper negates the final scalar (saves one
    # VALU op per element).
    val = coef * jnp.log(sel + EPS)

    # Defer the expensive reduction: collapse sublane-groups with VPU adds into
    # one lane-dense (8, 128) partial-sum block per tile; final sum is in JAX.
    rows = val.shape[0]
    out_ref[...] = jnp.sum(val.reshape(rows // 8, 8, LANES), axis=0)


def heatmap_loss(inputs, targets, reduction="mean", tile_rows=8192):
    """Pallas implementation of HeatmapLoss.forward (alpha=2, beta=4)."""
    assert inputs.shape == targets.shape
    B = inputs.shape[0]
    n = int(inputs.size)

    x = inputs.reshape(-1)
    t = targets.reshape(-1)

    # Lane-dense 2D layout: (rows, 128), rows a multiple of 8.  Minimize
    # padding: choose the tile count from the target tile size, then shrink the
    # tile to the smallest 8-aligned size that covers the rows.
    rows_min = max(8, _cdiv(_cdiv(n, LANES), 8) * 8)
    tile_target = max(8, (min(int(tile_rows), rows_min) // 8) * 8)
    num_tiles = _cdiv(rows_min, tile_target)
    tile_rows = _cdiv(_cdiv(rows_min, num_tiles), 8) * 8
    rows = num_tiles * tile_rows
    padded = rows * LANES

    needs_pad = padded != n
    if needs_pad:
        # Zero padding contributes exactly 0 loss (see kernel comment).
        x = jnp.pad(x, (0, padded - n))
        t = jnp.pad(t, (0, padded - n))
    x = x.reshape(rows, LANES)
    t = t.reshape(rows, LANES)

    in_bytes = x.dtype.itemsize + t.dtype.itemsize
    cost = pl.CostEstimate(
        flops=10 * padded,
        transcendentals=padded,
        bytes_accessed=in_bytes * padded + num_tiles * 8 * LANES * 4,
    )

    compiler_params = pltpu.CompilerParams(
        dimension_semantics=("parallel",),
        vmem_limit_bytes=32 * 1024 * 1024,
        # When a pad was materialized upstream, let XLA fuse it into the
        # pallas_call operands instead of writing the padded copies to HBM.
        allow_input_fusion=[True, True] if needs_pad else None,
    )

    partials = pl.pallas_call(
        _heatmap_loss_kernel,
        out_shape=jax.ShapeDtypeStruct((num_tiles * 8, LANES), jnp.float32),
        grid=(num_tiles,),
        in_specs=[
            pl.BlockSpec((tile_rows, LANES), lambda i: (i, 0)),
            pl.BlockSpec((tile_rows, LANES), lambda i: (i, 0)),
        ],
        out_specs=pl.BlockSpec((8, LANES), lambda i: (i, 0)),
        compiler_params=compiler_params,
        cost_estimate=cost,
    )(x, t)

    total = -jnp.sum(partials)

    if reduction in ("mean", "sum"):
        # NOTE: the PyTorch module's 'sum' branch reuses batch_size from the
        # 'mean' branch (it would NameError standalone); both divide by B here.
        return total / jnp.float32(B)
    # TODO(synk): reduction=None in PyTorch returns the elementwise loss map;
    # only the reduced ('mean'/'sum') paths are implemented here.
    return total


def _reference(inputs, targets):
    x = inputs.astype(jnp.float32)
    t = targets.astype(jnp.float32)
    center_id = (t == 1.0).astype(jnp.float32)
    other_id = (t != 1.0).astype(jnp.float32)
    center_loss = -center_id * (1.0 - x) ** ALPHA * jnp.log(x + EPS)
    other_loss = -other_id * (1.0 - t) ** BETA * (x ** ALPHA) * jnp.log(1.0 - x + EPS)
    return jnp.sum(center_loss + other_loss) / x.shape[0]


if __name__ == "__main__":
    key = jax.random.PRNGKey(0)

    def make_inputs(k, shape, dtype=jnp.float32):
        k1, k2, k3 = jax.random.split(k, 3)
        inp = jax.nn.sigmoid(jax.random.normal(k1, shape, dtype=jnp.float32))
        tgt = jax.random.uniform(k2, shape, dtype=jnp.float32)
        peak = jax.random.uniform(k3, shape) > 0.95
        tgt = jnp.where(peak, jnp.float32(1.0), tgt)
        return inp.astype(dtype), tgt.astype(dtype)

    ka, kb, kc, kd = jax.random.split(key, 4)

    # 1) Small aligned shape: n = 2*64*8 = 1024 = 8*128 -> fast path, no pad.
    B, N, C = 2, 64, 8
    inputs, targets = make_inputs(ka, (B, N, C))
    out = jax.block_until_ready(heatmap_loss(inputs, targets, reduction="mean"))
    ref = _reference(inputs, targets)
    assert jnp.allclose(out, ref, rtol=1e-5, atol=1e-5), (out, ref)

    # 2) Larger shape with a tiny tile to exercise the multi-tile grid (no pad).
    B2, N2, C2 = 2, 512, 8
    inputs2, targets2 = make_inputs(kb, (B2, N2, C2))
    out2 = jax.block_until_ready(
        heatmap_loss(inputs2, targets2, reduction="mean", tile_rows=16)
    )
    ref2 = _reference(inputs2, targets2)
    assert jnp.allclose(out2, ref2, rtol=1e-5, atol=1e-5), (out2, ref2)

    # 3) Odd shape that forces (minimal) zero padding.
    B3, N3, C3 = 2, 50, 8
    inputs3, targets3 = make_inputs(kc, (B3, N3, C3))
    out3 = jax.block_until_ready(heatmap_loss(inputs3, targets3, reduction="mean"))
    ref3 = _reference(inputs3, targets3)
    assert jnp.allclose(out3, ref3, rtol=1e-5, atol=1e-5), (out3, ref3)

    # 4) bf16 inputs passed through without wrapper upcast (halves HBM traffic).
    inputs4, targets4 = make_inputs(kd, (2, 128, 8), dtype=jnp.bfloat16)
    out4 = jax.block_until_ready(heatmap_loss(inputs4, targets4, reduction="mean"))
    ref4 = _reference(inputs4, targets4)
    assert jnp.allclose(out4, ref4, rtol=1e-4, atol=1e-4), (out4, ref4)

    print("KERNEL_OK")
</pallas_src>

<mosaic_0001>
module attributes {stable_mosaic.version = 11 : i64} {
  func.func @_heatmap_loss_kernel(%arg0: i32, %arg1: memref<8x128xf32, #tpu.memory_space<vmem>>, %arg2: memref<8x128xf32, #tpu.memory_space<vmem>>, %arg3: memref<8x128xf32, #tpu.memory_space<vmem>>) attributes {dimension_semantics = [#tpu.dimension_semantics<parallel>], iteration_bounds = array<i64: 1>, scalar_prefetch = 0 : i64, scratch_operands = 0 : i64, tpu.core_type = #tpu.core_type<tc>, window_params = [{transform_indices = @transform_0, window_bounds = array<i64: 8, 128>}, {transform_indices = @transform_1, window_bounds = array<i64: 8, 128>}, {transform_indices = @transform_2, window_bounds = array<i64: 8, 128>}]} {
    %c0 = arith.constant 0 : index
    %c0_0 = arith.constant 0 : index
    %0 = vector.load %arg1[%c0, %c0_0] : memref<8x128xf32, #tpu.memory_space<vmem>>, vector<8x128xf32>
    %c0_1 = arith.constant 0 : index
    %c0_2 = arith.constant 0 : index
    %1 = vector.load %arg2[%c0_1, %c0_2] : memref<8x128xf32, #tpu.memory_space<vmem>>, vector<8x128xf32>
    %cst = arith.constant 1.000000e+00 : f32
    %2 = vector.broadcast %cst : f32 to vector<8x128xf32>
    %3 = arith.cmpf oeq, %1, %2 : vector<8x128xf32>
    %cst_3 = arith.constant 1.000000e+00 : f32
    %4 = vector.broadcast %cst_3 : f32 to vector<8x128xf32>
    %5 = arith.subf %4, %0 : vector<8x128xf32>
    %cst_4 = arith.constant 1.000000e+00 : f32
    %6 = vector.broadcast %cst_4 : f32 to vector<8x128xf32>
    %7 = arith.subf %6, %1 : vector<8x128xf32>
    %8 = arith.select %3, %0, %5 : vector<8x128xi1>, vector<8x128xf32>
    %9 = arith.mulf %7, %7 : vector<8x128xf32>
    %10 = arith.mulf %9, %0 : vector<8x128xf32>
    %11 = arith.select %3, %5, %10 : vector<8x128xi1>, vector<8x128xf32>
    %12 = arith.mulf %11, %11 : vector<8x128xf32>
    %cst_5 = arith.constant 9.99999982E-15 : f32
    %13 = vector.broadcast %cst_5 : f32 to vector<8x128xf32>
    %14 = arith.addf %8, %13 : vector<8x128xf32>
    %15 = math.log %14 : vector<8x128xf32>
    %16 = arith.mulf %12, %15 : vector<8x128xf32>
    %17 = vector.shape_cast %16 : vector<8x128xf32> to vector<1x8x128xf32>
    %cst_6 = arith.constant dense<0.000000e+00> : vector<8x128xf32>
    %18 = vector.multi_reduction <add>, %17, %cst_6 [0] : vector<1x8x128xf32> to vector<8x128xf32>
    %c0_7 = arith.constant 0 : index
    %c0_8 = arith.constant 0 : index
    %19 = vector.load %arg3[%c0_7, %c0_8] : memref<8x128xf32, #tpu.memory_space<vmem>>, vector<8x128xf32>
    tpu.vector_store %arg3[%c0_7, %c0_8], %18 {strides = array<i32>} : memref<8x128xf32, #tpu.memory_space<vmem>>, vector<8x128xf32>,
    return
  }
  func.func @transform_0(%arg0: i32) -> (i32, i32) {
    %c0_i32 = arith.constant 0 : i32
    %c0_i32_0 = arith.constant 0 : i32
    return %arg0, %c0_i32 : i32, i32
  }
  func.func @transform_1(%arg0: i32) -> (i32, i32) {
    %c0_i32 = arith.constant 0 : i32
    %c0_i32_0 = arith.constant 0 : i32
    return %arg0, %c0_i32 : i32, i32
  }
  func.func @transform_2(%arg0: i32) -> (i32, i32) {
    %c0_i32 = arith.constant 0 : i32
    %c0_i32_0 = arith.constant 0 : i32
    return %arg0, %c0_i32 : i32, i32
  }
}

</mosaic_0001>

<llo_original>
// kernel: tpu_custom_call.1
$region0: #{tpu_custom_call.1}
  #allocation0 [shape = 'u32[]', space=smem, size = 0x4, offset = 0x4, fixed_abs, tag = 'smem constant byte address 0x4 - core index']
  #allocation1 [shape = 'u32[144,128]{1,0:T(1,128)}', space=vmem, size = 0x12000, scoped, tag = 'internal scratch']
  %s0 = inlined_call_operand.hbm [shape: f32[8,128], index: 0, kind: input, shape index: {}]
  %s1 = inlined_call_operand.hbm [shape: f32[8,128], index: 1, kind: input, shape index: {}]
  %s2 = inlined_call_operand.hbm [shape: f32[8,128], index: 2, kind: output, shape index: {}]
  %s3 = sld [smem:[#allocation0]]
  $region26: #{tpu_custom_call.1} parent=0
    _
  %s5 = ssub.s32 1, %s3
  %s6 = scalar_select 0, %s5, %s3
  $region1: #{tpu_custom_call.1} parent=0
    #allocation2 [shape = 'u8[4096]{0}', space=vmem, size = 0x1000, scoped, tag = 'input window, operand 0, single buffered']
    #allocation3 [shape = 's32[1]{0}', space=sflag, size = 0x4, scoped, tag = 'scoped memory for tpu_custom_call.1']
    #allocation4 [shape = 's32[1]{0}', space=sflag, size = 0x4, scoped, tag = 'scoped memory for tpu_custom_call.1']
    #allocation5 [shape = 'u8[4096]{0}', space=vmem, size = 0x1000, scoped, tag = 'input window, operand 1, single buffered']
    #allocation6 [shape = 's32[1]{0}', space=sflag, size = 0x4, scoped, tag = 'scoped memory for tpu_custom_call.1']
    #allocation7 [shape = 'u8[4096]{0}', space=vmem, size = 0x1000, scoped, tag = 'output window, operand 0, single buffered']
    %7 = vsyncpa [#allocation3], 0
    %8 = vsyncpa [#allocation6], 0
    %9 = vsyncpa [#allocation4], 0
    // Predicated region
    $region2: #{tpu_custom_call.1} parent=1 // pred_check
      _
    $region3: #{tpu_custom_call.1} parent=1 // pred_check_branch
      %11 = sbr.rel (0) target = $region5
    $region4: #{tpu_custom_call.1} parent=1 // pred_region
      %s13 = ssub.s32 128, 128
      %14 = vsyncadd [#allocation3], %s13
      %s16 = sshll.u32 [#allocation2], 4
      %s17 = int_to_ptr.vmem [resolvable:$true] %s16
      %19 = dma.hbm_to_vmem [thread:$0]  %s0, 128, %s17, [#allocation3]
    $region5: #{tpu_custom_call.1} parent=1 // pred_fallthru
      _
    // Predicated region
    $region6: #{tpu_custom_call.1} parent=1 // pred_check
      _
    $region7: #{tpu_custom_call.1} parent=1 // pred_check_branch
      %21 = sbr.rel (0) target = $region9
    $region8: #{tpu_custom_call.1} parent=1 // pred_region
      %s23 = ssub.s32 128, 128
      %24 = vsyncadd [#allocation6], %s23
      %s26 = sshll.u32 [#allocation5], 4
      %s27 = int_to_ptr.vmem [resolvable:$true] %s26
      %29 = dma.hbm_to_vmem [thread:$0]  %s1, 128, %s27, [#allocation6]
    $region9: #{tpu_custom_call.1} parent=1 // pred_fallthru
      _
    // Predicated region
    $region10: #{tpu_custom_call.1} parent=1 // pred_check
      _
    $region11: #{tpu_custom_call.1} parent=1 // pred_check_branch
      %31 = sbr.rel (0) target = $region13
    $region12: #{tpu_custom_call.1} parent=1 // pred_region
      %32 = dma.done [#allocation3], 128
    $region13: #{tpu_custom_call.1} parent=1 // pred_fallthru
      _
    // Predicated region
    $region14: #{tpu_custom_call.1} parent=1 // pred_check
      _
    $region15: #{tpu_custom_call.1} parent=1 // pred_check_branch
      %34 = sbr.rel (0) target = $region17
    $region16: #{tpu_custom_call.1} parent=1 // pred_region
      %35 = dma.done [#allocation6], 128
    $region17: #{tpu_custom_call.1} parent=1 // pred_fallthru
      _
    %v36 = vld [vmem:[#allocation2] sm:$0xff]
    %v37 = vld [vmem:[#allocation5] sm:$0xff]
    %vm38 = vcmp.eq.f32.partialorder %v37, 1.0
    %v39 = vsub.f32 1.0, %v36
    %v40 = vsub.f32 1.0, %v37
    %v41 = vsel %vm38, %v36, %v39
    %v42 = vmul.f32 %v40, %v40
    %v43 = vmul.f32 %v42, %v36
    %v44 = vsel %vm38, %v39, %v43
    %v45 = vmul.f32 %v44, %v44
    %v46 = vadd.f32 %v41, 1e-14
    %v47 = vlog2.pop %v46
    %v48 = vmul.f32 %v47, 0.6931472
    %v49 = vmul.f32 %v45, %v48
    %v50 = vadd.f32 %v49, 0.0
    %51 = vst [vmem:[#allocation7] sm:$0xff] %v50
    // Predicated region
    $region18: #{tpu_custom_call.1} parent=1 // pred_check
      _
    $region19: #{tpu_custom_call.1} parent=1 // pred_check_branch
      %53 = sbr.rel (0) target = $region21
    $region20: #{tpu_custom_call.1} parent=1 // pred_region
      %s55 = ssub.s32 128, 128
      %56 = vsyncadd [#allocation4], %s55
      %s58 = sshll.u32 [#allocation7], 4
      %s59 = int_to_ptr.vmem [resolvable:$true] %s58
      %61 = dma.vmem_to_hbm [thread:$0]  %s59, 128, %s2, [#allocation4]
    $region21: #{tpu_custom_call.1} parent=1 // pred_fallthru
      _
    // Predicated region
    $region22: #{tpu_custom_call.1} parent=1 // pred_check
      _
    $region23: #{tpu_custom_call.1} parent=1 // pred_check_branch
      %63 = sbr.rel (0) target = $region25
    $region24: #{tpu_custom_call.1} parent=1 // pred_region
      %64 = dma.done [#allocation4], 128
    $region25: #{tpu_custom_call.1} parent=1 // pred_fallthru
      _
    %65 = vsyncpa [#allocation3], 1
    %66 = vsyncpa [#allocation6], 1
    %67 = vsyncpa [#allocation4], 1

</llo_original>
